<compile_context>
chip_gen: v6e
topology: v6e:2x2x1
jax: 0.10.0
libtpu: 0.0.40
codegen_flags: <defaults>
</compile_context>

<pallas_src>
import jax
import jax.numpy as jnp
from jax.experimental import pallas as pl
from jax.experimental.pallas import tpu as pltpu


def _round_up(x: int, m: int) -> int:
    return (x + m - 1) // m * m


def tag_encoder_kernel(ids_ref, emb_ref, out_ref):
    # ids_ref: (tb, S)      int32  VMEM  (same block for every k)
    # emb_ref: (tk, D_pad)  bf16   VMEM  (K tile k of the embedding table)
    # out_ref: (tb, D_pad)  f32    VMEM  (resident across k -> accumulator)
    k = pl.program_id(1)

    @pl.when(k == 0)
    def _init():
        out_ref[...] = jnp.zeros_like(out_ref)

    tb, S = ids_ref.shape
    tk = emb_ref.shape[0]

    # Shift ids into this K tile's local coordinate system once (tiny (tb, S)
    # op) instead of offsetting the (tb, tk) iota every invocation.
    ids_rel = ids_ref[...] - k * tk                              # (tb, S) i32
    tag_iota = jax.lax.broadcasted_iota(jnp.int32, (tb, tk), 1)  # (tb, tk)

    # Per-tile tag counts, built by a short fully-unrolled loop over S --
    # the (tb, S, tk) one-hot is never materialized.  S is a static, small
    # Python int; for very large S this would become a chunked fori_loop.
    counts = jnp.zeros((tb, tk), jnp.float32)
    for s in range(S):
        ids_s = ids_rel[:, s:s + 1]                   # (tb, 1), static slice
        counts = counts + (ids_s == tag_iota).astype(jnp.float32)

    # One MXU contraction per (B tile, K tile): (tb, tk) @ (tk, D_pad).
    # counts <= S are exact in bf16 (integers up to 256); accumulate in f32
    # directly into the resident output block.
    out_ref[...] += jnp.dot(counts.astype(emb_ref.dtype), emb_ref[...],
                            preferred_element_type=jnp.float32)


def tag_encoder_forward(tag_ids, embedding, *, tb_max=128, tk=256,
                        table_dtype=jnp.bfloat16):
    """tag_ids: (B, S) int, embedding: (n_tags, D) f32 -> (B, D) f32.

    Matches TagEncoder.forward: embedding lookup (padding_idx=0 row is row 0
    of the table) summed over the sequence axis.
    """
    B, S = tag_ids.shape
    n_tags, D = embedding.shape

    ids = tag_ids.astype(jnp.int32)          # int64 ids assumed to fit int32
    emb = embedding.astype(table_dtype)      # stream the table in bf16

    # Adapt the B tile to the batch so small batches don't pay for 128 rows.
    tb = min(tb_max, _round_up(max(B, 1), 8))

    # Pad every axis up to its tile size.  Padded ids are 0 and only affect
    # padded output rows (sliced off); padded table rows/cols are zero.
    B_pad = _round_up(B, tb)
    K_pad = _round_up(n_tags, tk)
    D_pad = _round_up(D, 128)                # lane-dense output block
    if B_pad != B:
        ids = jnp.pad(ids, ((0, B_pad - B), (0, 0)))
    if K_pad != n_tags or D_pad != D:
        emb = jnp.pad(emb, ((0, K_pad - n_tags), (0, D_pad - D)))

    grid = (B_pad // tb, K_pad // tk)        # reduction (K) innermost

    out = pl.pallas_call(
        tag_encoder_kernel,
        out_shape=jax.ShapeDtypeStruct((B_pad, D_pad), jnp.float32),
        grid_spec=pltpu.PrefetchScalarGridSpec(
            num_scalar_prefetch=0,
            grid=grid,
            in_specs=[
                # tag ids: depends only on the B tile (fetched once per i)
                pl.BlockSpec((tb, S), lambda i, k: (i, 0)),
                # embedding table K tile: streamed & double-buffered behind
                # the MXU across the reduction axis
                pl.BlockSpec((tk, D_pad), lambda i, k: (k, 0)),
            ],
            # k-invariant index map -> output block stays resident in VMEM
            # across the whole reduction and is written back once per B tile.
            out_specs=pl.BlockSpec((tb, D_pad), lambda i, k: (i, 0)),
        ),
        compiler_params=pltpu.CompilerParams(
            # B tiles are independent -> shard across v7x's 2 TCs;
            # K is the accumulated reduction.
            dimension_semantics=("parallel", "arbitrary")),
    )(ids, emb)

    return out[:B, :D]


if __name__ == "__main__":
    # Small, module-consistent shapes; deliberately not tile-aligned so the
    # padding paths (n_tags -> 512, D -> 384 is already a 128-multiple? no,
    # 384 is; B -> 32 tile) are exercised.
    B, S = 32, 12
    n_tags, D = 500, 384

    key = jax.random.PRNGKey(0)
    k_emb, k_ids = jax.random.split(key)

    # nn.Embedding(padding_idx=0) default init: N(0,1) with row 0 zeroed.
    embedding = jax.random.normal(k_emb, (n_tags, D), dtype=jnp.float32)
    embedding = embedding.at[0].set(0.0)

    # Deterministic tag ids, including explicit padding (0) entries.
    tag_ids = jax.random.randint(k_ids, (B, S), 0, n_tags, dtype=jnp.int32)
    tag_ids = tag_ids.at[:, -3:].set(0)

    out = jax.block_until_ready(tag_encoder_forward(tag_ids, embedding))

    # Pure-JAX reference (table quantized to bf16 exactly as the kernel
    # streams it): gather rows + sum over the sequence axis, in f32.
    emb_q = embedding.astype(jnp.bfloat16).astype(jnp.float32)
    ref = jnp.take(emb_q, tag_ids, axis=0).sum(axis=1)

    assert out.shape == (B, D)
    assert jnp.allclose(out, ref, atol=1e-3, rtol=1e-3), "mismatch vs reference"
    print("KERNEL_OK")
</pallas_src>

<mosaic_0001>
module attributes {stable_mosaic.version = 11 : i64} {
  func.func @tag_encoder_kernel(%arg0: i32, %arg1: i32, %arg2: memref<32x12xi32, #tpu.memory_space<vmem>>, %arg3: memref<256x384xbf16, #tpu.memory_space<vmem>>, %arg4: memref<32x384xf32, #tpu.memory_space<vmem>>) attributes {dimension_semantics = [#tpu.dimension_semantics<parallel>, #tpu.dimension_semantics<arbitrary>], iteration_bounds = array<i64: 1, 2>, scalar_prefetch = 0 : i64, scratch_operands = 0 : i64, tpu.core_type = #tpu.core_type<tc>, window_params = [{transform_indices = @transform_0, window_bounds = array<i64: 32, 12>}, {transform_indices = @transform_1, window_bounds = array<i64: 256, 384>}, {transform_indices = @transform_2, window_bounds = array<i64: 32, 384>}]} {
    %c0_i32 = arith.constant 0 : i32
    %0 = arith.cmpi eq, %arg1, %c0_i32 : i32
    %1 = arith.extui %0 : i1 to i32
    %c0_i32_0 = arith.constant 0 : i32
    %2 = arith.cmpi ne, %1, %c0_i32_0 : i32
    scf.if %2 {
      %cst_9 = arith.constant 0.000000e+00 : f32
      %87 = vector.broadcast %cst_9 : f32 to vector<32x384xf32>
      %c0_10 = arith.constant 0 : index
      %c0_11 = arith.constant 0 : index
      %88 = vector.load %arg4[%c0_10, %c0_11] : memref<32x384xf32, #tpu.memory_space<vmem>>, vector<32x384xf32>
      tpu.vector_store %arg4[%c0_10, %c0_11], %87 {strides = array<i32>} : memref<32x384xf32, #tpu.memory_space<vmem>>, vector<32x384xf32>,
    } else {
    }
    %c0 = arith.constant 0 : index
    %c0_1 = arith.constant 0 : index
    %3 = vector.load %arg2[%c0, %c0_1] : memref<32x12xi32, #tpu.memory_space<vmem>>, vector<32x12xi32>
    %c256_i32 = arith.constant 256 : i32
    %4 = arith.muli %arg1, %c256_i32 : i32
    %5 = vector.broadcast %4 : i32 to vector<32x12xi32>
    %6 = arith.subi %3, %5 : vector<32x12xi32>
    %7 = tpu.iota {dimensions = array<i32: 1>} : vector<32x256xi32>
    %cst = arith.constant 0.000000e+00 : f32
    %8 = vector.broadcast %cst : f32 to vector<32x256xf32>
    %9 = vector.extract_strided_slice %6 {offsets = [0, 0], sizes = [32, 1], strides = [1, 1]} : vector<32x12xi32> to vector<32x1xi32>
    %10 = vector.broadcast %9 : vector<32x1xi32> to vector<32x256xi32>
    %11 = arith.cmpi eq, %10, %7 : vector<32x256xi32>
    %12 = arith.extui %11 : vector<32x256xi1> to vector<32x256xi32>
    %13 = arith.sitofp %12 : vector<32x256xi32> to vector<32x256xf32>
    %14 = arith.addf %8, %13 : vector<32x256xf32>
    %15 = vector.extract_strided_slice %6 {offsets = [0, 1], sizes = [32, 1], strides = [1, 1]} : vector<32x12xi32> to vector<32x1xi32>
    %16 = vector.broadcast %15 : vector<32x1xi32> to vector<32x256xi32>
    %17 = arith.cmpi eq, %16, %7 : vector<32x256xi32>
    %18 = arith.extui %17 : vector<32x256xi1> to vector<32x256xi32>
    %19 = arith.sitofp %18 : vector<32x256xi32> to vector<32x256xf32>
    %20 = arith.addf %14, %19 : vector<32x256xf32>
    %21 = vector.extract_strided_slice %6 {offsets = [0, 2], sizes = [32, 1], strides = [1, 1]} : vector<32x12xi32> to vector<32x1xi32>
    %22 = vector.broadcast %21 : vector<32x1xi32> to vector<32x256xi32>
    %23 = arith.cmpi eq, %22, %7 : vector<32x256xi32>
    %24 = arith.extui %23 : vector<32x256xi1> to vector<32x256xi32>
    %25 = arith.sitofp %24 : vector<32x256xi32> to vector<32x256xf32>
    %26 = arith.addf %20, %25 : vector<32x256xf32>
    %27 = vector.extract_strided_slice %6 {offsets = [0, 3], sizes = [32, 1], strides = [1, 1]} : vector<32x12xi32> to vector<32x1xi32>
    %28 = vector.broadcast %27 : vector<32x1xi32> to vector<32x256xi32>
    %29 = arith.cmpi eq, %28, %7 : vector<32x256xi32>
    %30 = arith.extui %29 : vector<32x256xi1> to vector<32x256xi32>
    %31 = arith.sitofp %30 : vector<32x256xi32> to vector<32x256xf32>
    %32 = arith.addf %26, %31 : vector<32x256xf32>
    %33 = vector.extract_strided_slice %6 {offsets = [0, 4], sizes = [32, 1], strides = [1, 1]} : vector<32x12xi32> to vector<32x1xi32>
    %34 = vector.broadcast %33 : vector<32x1xi32> to vector<32x256xi32>
    %35 = arith.cmpi eq, %34, %7 : vector<32x256xi32>
    %36 = arith.extui %35 : vector<32x256xi1> to vector<32x256xi32>
    %37 = arith.sitofp %36 : vector<32x256xi32> to vector<32x256xf32>
    %38 = arith.addf %32, %37 : vector<32x256xf32>
    %39 = vector.extract_strided_slice %6 {offsets = [0, 5], sizes = [32, 1], strides = [1, 1]} : vector<32x12xi32> to vector<32x1xi32>
    %40 = vector.broadcast %39 : vector<32x1xi32> to vector<32x256xi32>
    %41 = arith.cmpi eq, %40, %7 : vector<32x256xi32>
    %42 = arith.extui %41 : vector<32x256xi1> to vector<32x256xi32>
    %43 = arith.sitofp %42 : vector<32x256xi32> to vector<32x256xf32>
    %44 = arith.addf %38, %43 : vector<32x256xf32>
    %45 = vector.extract_strided_slice %6 {offsets = [0, 6], sizes = [32, 1], strides = [1, 1]} : vector<32x12xi32> to vector<32x1xi32>
    %46 = vector.broadcast %45 : vector<32x1xi32> to vector<32x256xi32>
    %47 = arith.cmpi eq, %46, %7 : vector<32x256xi32>
    %48 = arith.extui %47 : vector<32x256xi1> to vector<32x256xi32>
    %49 = arith.sitofp %48 : vector<32x256xi32> to vector<32x256xf32>
    %50 = arith.addf %44, %49 : vector<32x256xf32>
    %51 = vector.extract_strided_slice %6 {offsets = [0, 7], sizes = [32, 1], strides = [1, 1]} : vector<32x12xi32> to vector<32x1xi32>
    %52 = vector.broadcast %51 : vector<32x1xi32> to vector<32x256xi32>
    %53 = arith.cmpi eq, %52, %7 : vector<32x256xi32>
    %54 = arith.extui %53 : vector<32x256xi1> to vector<32x256xi32>
    %55 = arith.sitofp %54 : vector<32x256xi32> to vector<32x256xf32>
    %56 = arith.addf %50, %55 : vector<32x256xf32>
    %57 = vector.extract_strided_slice %6 {offsets = [0, 8], sizes = [32, 1], strides = [1, 1]} : vector<32x12xi32> to vector<32x1xi32>
    %58 = vector.broadcast %57 : vector<32x1xi32> to vector<32x256xi32>
    %59 = arith.cmpi eq, %58, %7 : vector<32x256xi32>
    %60 = arith.extui %59 : vector<32x256xi1> to vector<32x256xi32>
    %61 = arith.sitofp %60 : vector<32x256xi32> to vector<32x256xf32>
    %62 = arith.addf %56, %61 : vector<32x256xf32>
    %63 = vector.extract_strided_slice %6 {offsets = [0, 9], sizes = [32, 1], strides = [1, 1]} : vector<32x12xi32> to vector<32x1xi32>
    %64 = vector.broadcast %63 : vector<32x1xi32> to vector<32x256xi32>
    %65 = arith.cmpi eq, %64, %7 : vector<32x256xi32>
    %66 = arith.extui %65 : vector<32x256xi1> to vector<32x256xi32>
    %67 = arith.sitofp %66 : vector<32x256xi32> to vector<32x256xf32>
    %68 = arith.addf %62, %67 : vector<32x256xf32>
    %69 = vector.extract_strided_slice %6 {offsets = [0, 10], sizes = [32, 1], strides = [1, 1]} : vector<32x12xi32> to vector<32x1xi32>
    %70 = vector.broadcast %69 : vector<32x1xi32> to vector<32x256xi32>
    %71 = arith.cmpi eq, %70, %7 : vector<32x256xi32>
    %72 = arith.extui %71 : vector<32x256xi1> to vector<32x256xi32>
    %73 = arith.sitofp %72 : vector<32x256xi32> to vector<32x256xf32>
    %74 = arith.addf %68, %73 : vector<32x256xf32>
    %75 = vector.extract_strided_slice %6 {offsets = [0, 11], sizes = [32, 1], strides = [1, 1]} : vector<32x12xi32> to vector<32x1xi32>
    %76 = vector.broadcast %75 : vector<32x1xi32> to vector<32x256xi32>
    %77 = arith.cmpi eq, %76, %7 : vector<32x256xi32>
    %78 = arith.extui %77 : vector<32x256xi1> to vector<32x256xi32>
    %79 = arith.sitofp %78 : vector<32x256xi32> to vector<32x256xf32>
    %80 = arith.addf %74, %79 : vector<32x256xf32>
    %c0_2 = arith.constant 0 : index
    %c0_3 = arith.constant 0 : index
    %81 = vector.load %arg4[%c0_2, %c0_3] : memref<32x384xf32, #tpu.memory_space<vmem>>, vector<32x384xf32>
    %82 = arith.truncf %80 : vector<32x256xf32> to vector<32x256xbf16>
    %c0_4 = arith.constant 0 : index
    %c0_5 = arith.constant 0 : index
    %83 = vector.load %arg3[%c0_4, %c0_5] : memref<256x384xbf16, #tpu.memory_space<vmem>>, vector<256x384xbf16>
    %cst_6 = arith.constant dense<0.000000e+00> : vector<32x384xf32>
    %84 = tpu.matmul %82, %83, %cst_6 {dimension_numbers = #tpu.dot_dimension_numbers<[1], [0], [0], [1], [0, 0, 1, 1], [], []>} : vector<32x256xbf16>, vector<256x384xbf16>, vector<32x384xf32> -> vector<32x384xf32>
    %85 = arith.addf %81, %84 : vector<32x384xf32>
    %c0_7 = arith.constant 0 : index
    %c0_8 = arith.constant 0 : index
    %86 = vector.load %arg4[%c0_7, %c0_8] : memref<32x384xf32, #tpu.memory_space<vmem>>, vector<32x384xf32>
    tpu.vector_store %arg4[%c0_7, %c0_8], %85 {strides = array<i32>} : memref<32x384xf32, #tpu.memory_space<vmem>>, vector<32x384xf32>,
    return
  }
  func.func @transform_0(%arg0: i32, %arg1: i32) -> (i32, i32) {
    %c0_i32 = arith.constant 0 : i32
    %c0_i32_0 = arith.constant 0 : i32
    return %arg0, %c0_i32 : i32, i32
  }
  func.func @transform_1(%arg0: i32, %arg1: i32) -> (i32, i32) {
    %c0_i32 = arith.constant 0 : i32
    %c0_i32_0 = arith.constant 0 : i32
    return %arg1, %c0_i32 : i32, i32
  }
  func.func @transform_2(%arg0: i32, %arg1: i32) -> (i32, i32) {
    %c0_i32 = arith.constant 0 : i32
    %c0_i32_0 = arith.constant 0 : i32
    return %arg0, %c0_i32 : i32, i32
  }
}

</mosaic_0001>

<llo_original>
// kernel: tpu_custom_call.1
$region0: #{tpu_custom_call.1}
  #allocation0 [shape = 'u32[]', space=smem, size = 0x4, offset = 0x4, fixed_abs, tag = 'smem constant byte address 0x4 - core index']
  #allocation1 [shape = 'u32[144,128]{1,0:T(1,128)}', space=vmem, size = 0x12000, scoped, tag = 'internal scratch']
  %s0 = inlined_call_operand.vmem [shape: s32[32,12], index: 0, kind: input, shape index: {}]
  %s1 = inlined_call_operand.hbm [shape: bf16[512,384], index: 1, kind: input, shape index: {}]
  %s2 = inlined_call_operand.hbm [shape: f32[32,384], index: 2, kind: output, shape index: {}]
  %s3 = sld [smem:[#allocation0]]
  $region49: #{tpu_custom_call.1} parent=0
    _
  %s5 = ssub.s32 1, %s3
  %s6 = scalar_select 0, %s5, %s3
  $region1: #{tpu_custom_call.1} parent=0
    #allocation2 [shape = 'u8[393216]{0}', space=vmem, size = 0x60000, scoped, tag = 'input window, operand 1']
    #allocation3 [shape = 's32[2]{0}', space=sflag, size = 0x8, scoped, tag = 'scoped memory for tpu_custom_call.1']
    #allocation4 [shape = 's32[2]{0}', space=sflag, size = 0x8, scoped, tag = 'scoped memory for tpu_custom_call.1']
    #allocation5 [shape = 'u8[49152]{0}', space=vmem, size = 0xc000, scoped, tag = 'output window, operand 0, single buffered']
    %7 = vsyncpa [#allocation3], 0
    %s8 = scalar_lea.sflag [#allocation3], 1
    %9 = vsyncpa %s8, 0
    %10 = vsyncpa [#allocation4], 0
    loop: start=0, step=1, limit=4
    $region2: #{tpu_custom_call.1} parent=1 // loop_pre_header
      _
    $region3: #{tpu_custom_call.1} parent=1 // loop_header
      %s12 = sphi 0, %s16
      %p13 = scmp.ge.s32.totalorder %s12, 4
      %s19 = sphi 0, %s31
      %s20 = sphi 0, %s27
      %s21 = sphi 0, %s19
      %s22 = sphi 0, %s20
      %s23 = sphi 0, %s21
      %s24 = sphi 0, %s22
      %s34 = sphi 0, %s36
      %s37 = sphi 0, %s34
      %s38 = sphi 0, %s37
      %s54 = sphi 0, %s38
      %s60 = sphi 0, %s62
      %s63 = sphi 0, %s60
      %s64 = sphi 0, %s63
      %s80 = sphi 0, %s64
      %s86 = sphi 0, %s88
      %s89 = sphi 0, %s86
      %s90 = sphi 0, %s89
      %s106 = sphi 0, %s90
    $region4: #{tpu_custom_call.1} parent=1 // loop_header_branch
      %15 = sbr.rel (%p13) target = $region8
    $region5: #{tpu_custom_call.1} parent=1 // loop_body
      %s17 = ssub.s32 %s12, 1
      %s18 = ssub.s32 %s12, 2
      %s25 = sadd.s32 1, %s20
      %p26 = scmp.ge.s32.totalorder %s25, 2
      %s27 = scalar_select %p26, 0, %s25
      %s28 = sadd.s32 1, %s19
      %s29 = scalar_select %p26, %s28, %s19
      %p30 = scmp.ge.s32.totalorder %s29, 1
      %s31 = scalar_select %p30, 0, %s29
      %s32 = ssub.s32 %s19, %s31
      %p33 = scmp.eq.s32.totalorder %s32, 0
      %s35 = sadd.s32 %s34, 1
      %s36 = scalar_select %p33, %s34, %s35
      %p39 = pneg %p33
      %p40 = scmp.eq.s32.totalorder %s12, 1
      %p41 = por %p39, %p40
      %p42 = scmp.ne.s32.totalorder %s34, %s37
      %p43 = scmp.eq.s32.totalorder %s12, 0
      %p44 = por %p42, %p43
      %p45 = scmp.ne.s32.totalorder %s34, %s37
      %p46 = scmp.eq.s32.totalorder %s17, 1
      %p47 = por %p45, %p46
      %p48 = scmp.ne.s32.totalorder %s37, %s38
      %p49 = scmp.eq.s32.totalorder %s17, 0
      %p50 = por %p48, %p49
      %p51 = scmp.ne.s32.totalorder %s37, %s38
      %p52 = scmp.eq.s32.totalorder %s18, 1
      %p53 = por %p51, %p52
      %p55 = scmp.ne.s32.totalorder %s38, %s54
      %p56 = scmp.eq.s32.totalorder %s18, 0
      %p57 = por %p55, %p56
      %s58 = ssub.s32 %s20, %s27
      %p59 = scmp.eq.s32.totalorder %s58, 0
      %s61 = sadd.s32 %s60, 1
      %s62 = scalar_select %p59, %s60, %s61
      %p65 = pneg %p59
      %p66 = scmp.eq.s32.totalorder %s12, 1
      %p67 = por %p65, %p66
      %p68 = scmp.ne.s32.totalorder %s60, %s63
      %p69 = scmp.eq.s32.totalorder %s12, 0
      %p70 = por %p68, %p69
      %p71 = scmp.ne.s32.totalorder %s60, %s63
      %p72 = scmp.eq.s32.totalorder %s17, 1
      %p73 = por %p71, %p72
      %p74 = scmp.ne.s32.totalorder %s63, %s64
      %p75 = scmp.eq.s32.totalorder %s17, 0
      %p76 = por %p74, %p75
      %p77 = scmp.ne.s32.totalorder %s63, %s64
      %p78 = scmp.eq.s32.totalorder %s18, 1
      %p79 = por %p77, %p78
      %p81 = scmp.ne.s32.totalorder %s64, %s80
      %p82 = scmp.eq.s32.totalorder %s18, 0
      %p83 = por %p81, %p82
      %s84 = ssub.s32 %s19, %s31
      %p85 = scmp.eq.s32.totalorder %s84, 0
      %s87 = sadd.s32 %s86, 1
      %s88 = scalar_select %p85, %s86, %s87
      %p91 = pneg %p85
      %p92 = scmp.eq.s32.totalorder %s12, 1
      %p93 = por %p91, %p92
      %p94 = scmp.ne.s32.totalorder %s86, %s89
      %p95 = scmp.eq.s32.totalorder %s12, 0
      %p96 = por %p94, %p95
      %p97 = scmp.ne.s32.totalorder %s86, %s89
      %p98 = scmp.eq.s32.totalorder %s17, 1
      %p99 = por %p97, %p98
      %p100 = scmp.ne.s32.totalorder %s89, %s90
      %p101 = scmp.eq.s32.totalorder %s17, 0
      %p102 = por %p100, %p101
      %p103 = scmp.ne.s32.totalorder %s89, %s90
      %p104 = scmp.eq.s32.totalorder %s18, 1
      %p105 = por %p103, %p104
      %p107 = scmp.ne.s32.totalorder %s90, %s106
      %p108 = scmp.eq.s32.totalorder %s18, 0
      %p109 = por %p107, %p108
      %p110 = scmp.le.s32.totalorder 1, %s12
      %p111 = scmp.lt.s32.totalorder %s12, 3
      %p112 = pnand %p110, %p111
      %p113 = pneg %p112
      // Predicated region
      $region9: #{tpu_custom_call.1} parent=5 // pred_check
        _
      $region10: #{tpu_custom_call.1} parent=5 // pred_check_branch
        %115 = sbr.rel (%p112) target = $region12
      $region11: #{tpu_custom_call.1} parent=5 // pred_region
        %s116 = ssub.s32 %s12, 1
        // Predicated region
        $region13: #{tpu_custom_call.1} parent=11 // pred_check
          %p117 = pneg %p50
        $region14: #{tpu_custom_call.1} parent=11 // pred_check_branch
          %119 = sbr.rel (%p117) target = $region16
        $region15: #{tpu_custom_call.1} parent=11 // pred_region
          %s120 = smul.u32 4, %s21
          %p121 = scmp.lt.s32.totalorder %s120, 3
          %s122 = scalar_select %p121, %s120, 3
          %s123 = smul.addr %s122, 8
          %s124 = scalar_lea.vmem %s0, %s123
          %s125 = smul.u32 4, %s21
        $region16: #{tpu_custom_call.1} parent=11 // pred_fallthru
          _
      $region12: #{tpu_custom_call.1} parent=5 // pred_fallthru
        _
      %p126 = scmp.lt.s32.totalorder %s12, 2
      // Predicated region
      $region17: #{tpu_custom_call.1} parent=5 // pred_check
        %p127 = pneg %p126
      $region18: #{tpu_custom_call.1} parent=5 // pred_check_branch
        %129 = sbr.rel (%p127) target = $region20
      $region19: #{tpu_custom_call.1} parent=5 // pred_region
        // Predicated region
        $region21: #{tpu_custom_call.1} parent=19 // pred_check
          %p130 = pneg %p70
        $region22: #{tpu_custom_call.1} parent=19 // pred_check_branch
          %132 = sbr.rel (%p130) target = $region24
        $region23: #{tpu_custom_call.1} parent=19 // pred_region
          %s133 = sand.u32 %s60, 1
          %s134 = scalar_lea.sflag [#allocation3], %s133
          %s135 = sand.u32 %s60, 1
          %s136 = smul.addr %s135, 384
          %s137 = scalar_lea.vmem [#allocation2], %s136
          %s138 = smul.u32 32, %s20
          %s140 = ssub.s32 6144, 6144
          %141 = vsyncadd %s134, %s140
          %s142 = smul.addr %s138, 3
          %s143 = smul.addr %s142, 64
          %s144 = scalar_lea.hbm %s1, %s143
          %s145 = sshll.u32 %s137, 4
          %s146 = int_to_ptr.vmem [resolvable:$true] %s145
          %151 = dma.hbm_to_vmem [thread:$0]  %s144, 6144, %s146, %s134, 192, 192, 12
        $region24: #{tpu_custom_call.1} parent=19 // pred_fallthru
          _
      $region20: #{tpu_custom_call.1} parent=5 // pred_fallthru
        _
      %p152 = scmp.le.s32.totalorder 1, %s12
      %p153 = scmp.lt.s32.totalorder %s12, 3
      %p154 = pnand %p152, %p153
      %p155 = pneg %p154
      // Predicated region
      $region25: #{tpu_custom_call.1} parent=5 // pred_check
        _
      $region26: #{tpu_custom_call.1} parent=5 // pred_check_branch
        %157 = sbr.rel (%p154) target = $region28
      $region27: #{tpu_custom_call.1} parent=5 // pred_region
        %s158 = ssub.s32 %s12, 1
        %s159 = sand.u32 %s63, 1
        %s160 = scalar_lea.sflag [#allocation3], %s159
        %s161 = sand.u32 %s63, 1
        %s162 = smul.addr %s161, 384
        %s163 = scalar_lea.vmem [#allocation2], %s162
        // Predicated region
        $region29: #{tpu_custom_call.1} parent=27 // pred_check
          %p164 = pneg %p76
        $region30: #{tpu_custom_call.1} parent=27 // pred_check_branch
          %166 = sbr.rel (%p164) target = $region32
        $region31: #{tpu_custom_call.1} parent=27 // pred_region
          %167 = dma.done %s160, 6144
        $region32: #{tpu_custom_call.1} parent=27 // pred_fallthru
          _
        %s168 = smul.u32 4, %s21
        %p169 = scmp.lt.s32.totalorder %s168, 3
        %s170 = scalar_select %p169, %s168, 3
        %s171 = smul.addr %s170, 8
        %s172 = scalar_lea.vmem %s0, %s171
        %p173 = pneg %p50
        %p174 = pneg %p47
        %s175 = sand.u32 %s63, 1
        %s176 = scalar_lea.sflag [#allocation3], %s175
        %s177 = sand.u32 %s63, 1
        %s178 = smul.addr %s177, 384
        %s179 = scalar_lea.vmem [#allocation2], %s178
        %p180 = pneg %p76
        %p181 = pneg %p73
        %p182 = pneg %p102
        %p183 = pneg %p99
        %s184 = smul.u32 4, %s21
        %p185 = scmp.lt.s32.totalorder %s184, 3
        %s186 = scalar_select %p185, %s184, 3
        %s187 = smul.addr %s186, 8
        %s188 = scalar_lea.vmem %s0, %s187
        %s189 = smul.u32 4, %s21
        %s190 = smul.u32 32, %s22
        %s191 = smul.u32 4, %s21
        %p193 = scmp.eq.s32.totalorder %s22, 0
        // Predicated region
        $region33: #{tpu_custom_call.1} parent=27 // pred_check
          %p194 = pneg %p193
        $region34: #{tpu_custom_call.1} parent=27 // pred_check_branch
          %196 = sbr.rel (%p194) target = $region36
        $region35: #{tpu_custom_call.1} parent=27 // pred_region
          %197 = vst [vmem:[#allocation5] sm:$0xff] 0.0
          %198 = vst [vmem:[#allocation5 + $0x8] sm:$0xff] 0.0
          %199 = vst [vmem:[#allocation5 + $0x10] sm:$0xff] 0.0
          %200 = vst [vmem:[#allocation5 + $0x18] sm:$0xff] 0.0
          %201 = vst [vmem:[#allocation5 + $0x20] sm:$0xff] 0.0
          %202 = vst [vmem:[#allocation5 + $0x28] sm:$0xff] 0.0
          %203 = vst [vmem:[#allocation5 + $0x30] sm:$0xff] 0.0
          %204 = vst [vmem:[#allocation5 + $0x38] sm:$0xff] 0.0
          %205 = vst [vmem:[#allocation5 + $0x40] sm:$0xff] 0.0
          %206 = vst [vmem:[#allocation5 + $0x48] sm:$0xff] 0.0
          %207 = vst [vmem:[#allocation5 + $0x50] sm:$0xff] 0.0
          %208 = vst [vmem:[#allocation5 + $0x58] sm:$0xff] 0.0
        $region36: #{tpu_custom_call.1} parent=27 // pred_fallthru
          _
        %v209 = vld [vmem:[%s188] sm:$0xff]
        %v210 = vld [vmem:[%s188 + $0x8] sm:$0xff]
        %v211 = vld [vmem:[%s188 + $0x10] sm:$0xff]
        %v212 = vld [vmem:[%s188 + $0x18] sm:$0xff]
        %s213 = smul.u32 %s22, 256
        %v214 = vstv %s213
        %v215 = vsub.s32 %v209, %v214
        %v216 = vsub.s32 %v210, %v214
        %v217 = vsub.s32 %v211, %v214
        %v218 = vsub.s32 %v212, %v214
        %v219 = vlaneseq
        %v220 = vand.u32 %v219, 127
        %v221 = vadd.s32 %v220, 128
        %222 = vset.pattern.permute.xlu0 0
        %223 = vperm.xlu0 %222, %v215
        %v224 = vpop.permute.xlu0 %223
        %225 = vset.pattern.permute.xlu0 0
        %226 = vperm.xlu0 %225, %v216
        %v227 = vpop.permute.xlu0 %226
        %228 = vset.pattern.permute.xlu0 0
        %229 = vperm.xlu0 %228, %v217
        %v230 = vpop.permute.xlu0 %229
        %231 = vset.pattern.permute.xlu0 0
        %232 = vperm.xlu0 %231, %v218
        %v233 = vpop.permute.xlu0 %232
        %vm234 = vcmp.eq.s32.totalorder %v224, %v220
        %vm235 = vcmp.eq.s32.totalorder %v224, %v221
        %vm236 = vcmp.eq.s32.totalorder %v227, %v220
        %vm237 = vcmp.eq.s32.totalorder %v227, %v221
        %vm238 = vcmp.eq.s32.totalorder %v230, %v220
        %vm239 = vcmp.eq.s32.totalorder %v230, %v221
        %vm240 = vcmp.eq.s32.totalorder %v233, %v220
        %vm241 = vcmp.eq.s32.totalorder %v233, %v221
        %v242 = vsel %vm234, 1, 0
        %v243 = vsel %vm235, 1, 0
        %v244 = vsel %vm236, 1, 0
        %v245 = vsel %vm237, 1, 0
        %v246 = vsel %vm238, 1, 0
        %v247 = vsel %vm239, 1, 0
        %v248 = vsel %vm240, 1, 0
        %v249 = vsel %vm241, 1, 0
        %v250 = vcvt.s32.f32 %v242
        %v251 = vcvt.s32.f32 %v243
        %v252 = vcvt.s32.f32 %v244
        %v253 = vcvt.s32.f32 %v245
        %v254 = vcvt.s32.f32 %v246
        %v255 = vcvt.s32.f32 %v247
        %v256 = vcvt.s32.f32 %v248
        %v257 = vcvt.s32.f32 %v249
        %v258 = vadd.f32 %v250, 0.0
        %v259 = vadd.f32 %v251, 0.0
        %v260 = vadd.f32 %v252, 0.0
        %v261 = vadd.f32 %v253, 0.0
        %v262 = vadd.f32 %v254, 0.0
        %v263 = vadd.f32 %v255, 0.0
        %v264 = vadd.f32 %v256, 0.0
        %v265 = vadd.f32 %v257, 0.0
        %266 = vset.pattern.permute.xlu0 1
        %267 = vperm.xlu0 %266, %v215
        %v268 = vpop.permute.xlu0 %267
        %269 = vset.pattern.permute.xlu0 1
        %270 = vperm.xlu0 %269, %v216
        %v271 = vpop.permute.xlu0 %270
        %272 = vset.pattern.permute.xlu0 1
        %273 = vperm.xlu0 %272, %v217
        %v274 = vpop.permute.xlu0 %273
        %275 = vset.pattern.permute.xlu0 1
        %276 = vperm.xlu0 %275, %v218
        %v277 = vpop.permute.xlu0 %276
        %vm278 = vcmp.eq.s32.totalorder %v268, %v220
        %vm279 = vcmp.eq.s32.totalorder %v268, %v221
        %vm280 = vcmp.eq.s32.totalorder %v271, %v220
        %vm281 = vcmp.eq.s32.totalorder %v271, %v221
        %vm282 = vcmp.eq.s32.totalorder %v274, %v220
        %vm283 = vcmp.eq.s32.totalorder %v274, %v221
        %vm284 = vcmp.eq.s32.totalorder %v277, %v220
        %vm285 = vcmp.eq.s32.totalorder %v277, %v221
        %v286 = vsel %vm278, 1, 0
        %v287 = vsel %vm279, 1, 0
        %v288 = vsel %vm280, 1, 0
        %v289 = vsel %vm281, 1, 0
        %v290 = vsel %vm282, 1, 0
        %v291 = vsel %vm283, 1, 0
        %v292 = vsel %vm284, 1, 0
        %v293 = vsel %vm285, 1, 0
        %v294 = vcvt.s32.f32 %v286
        %v295 = vcvt.s32.f32 %v287
        %v296 = vcvt.s32.f32 %v288
        %v297 = vcvt.s32.f32 %v289
        %v298 = vcvt.s32.f32 %v290
        %v299 = vcvt.s32.f32 %v291
        %v300 = vcvt.s32.f32 %v292
        %v301 = vcvt.s32.f32 %v293
        %v302 = vadd.f32 %v258, %v294
        %v303 = vadd.f32 %v259, %v295
        %v304 = vadd.f32 %v260, %v296
        %v305 = vadd.f32 %v261, %v297
        %v306 = vadd.f32 %v262, %v298
        %v307 = vadd.f32 %v263, %v299
        %v308 = vadd.f32 %v264, %v300
        %v309 = vadd.f32 %v265, %v301
        %310 = vset.pattern.permute.xlu0 2
        %311 = vperm.xlu0 %310, %v215
        %v312 = vpop.permute.xlu0 %311
        %313 = vset.pattern.permute.xlu0 2
        %314 = vperm.xlu0 %313, %v216
        %v315 = vpop.permute.xlu0 %314
        %316 = vset.pattern.permute.xlu0 2
        %317 = vperm.xlu0 %316, %v217
        %v318 = vpop.permute.xlu0 %317
        %319 = vset.pattern.permute.xlu0 2
        %320 = vperm.xlu0 %319, %v218
        %v321 = vpop.permute.xlu0 %320
        %vm322 = vcmp.eq.s32.totalorder %v312, %v220
        %vm323 = vcmp.eq.s32.totalorder %v312, %v221
        %vm324 = vcmp.eq.s32.totalorder %v315, %v220
        %vm325 = vcmp.eq.s32.totalorder %v315, %v221
        %vm326 = vcmp.eq.s32.totalorder %v318, %v220
        %vm327 = vcmp.eq.s32.totalorder %v318, %v221
        %vm328 = vcmp.eq.s32.totalorder %v321, %v220
        %vm329 = vcmp.eq.s32.totalorder %v321, %v221
        %v330 = vsel %vm322, 1, 0
        %v331 = vsel %vm323, 1, 0
        %v332 = vsel %vm324, 1, 0
        %v333 = vsel %vm325, 1, 0
        %v334 = vsel %vm326, 1, 0
        %v335 = vsel %vm327, 1, 0
        %v336 = vsel %vm328, 1, 0
        %v337 = vsel %vm329, 1, 0
        %v338 = vcvt.s32.f32 %v330
        %v339 = vcvt.s32.f32 %v331
        %v340 = vcvt.s32.f32 %v332
        %v341 = vcvt.s32.f32 %v333
        %v342 = vcvt.s32.f32 %v334
        %v343 = vcvt.s32.f32 %v335
        %v344 = vcvt.s32.f32 %v336
        %v345 = vcvt.s32.f32 %v337
        %v346 = vadd.f32 %v302, %v338
        %v347 = vadd.f32 %v303, %v339
        %v348 = vadd.f32 %v304, %v340
        %v349 = vadd.f32 %v305, %v341
        %v350 = vadd.f32 %v306, %v342
        %v351 = vadd.f32 %v307, %v343
        %v352 = vadd.f32 %v308, %v344
        %v353 = vadd.f32 %v309, %v345
        %354 = vset.pattern.permute.xlu0 3
        %355 = vperm.xlu0 %354, %v215
        %v356 = vpop.permute.xlu0 %355
        %357 = vset.pattern.permute.xlu0 3
        %358 = vperm.xlu0 %357, %v216
        %v359 = vpop.permute.xlu0 %358
        %360 = vset.pattern.permute.xlu0 3
        %361 = vperm.xlu0 %360, %v217
        %v362 = vpop.permute.xlu0 %361
        %363 = vset.pattern.permute.xlu0 3
        %364 = vperm.xlu0 %363, %v218
        %v365 = vpop.permute.xlu0 %364
        %vm366 = vcmp.eq.s32.totalorder %v356, %v220
        %vm367 = vcmp.eq.s32.totalorder %v356, %v221
        %vm368 = vcmp.eq.s32.totalorder %v359, %v220
        %vm369 = vcmp.eq.s32.totalorder %v359, %v221
        %vm370 = vcmp.eq.s32.totalorder %v362, %v220
        %vm371 = vcmp.eq.s32.totalorder %v362, %v221
        %vm372 = vcmp.eq.s32.totalorder %v365, %v220
        %vm373 = vcmp.eq.s32.totalorder %v365, %v221
        %v374 = vsel %vm366, 1, 0
        %v375 = vsel %vm367, 1, 0
        %v376 = vsel %vm368, 1, 0
        %v377 = vsel %vm369, 1, 0
        %v378 = vsel %vm370, 1, 0
        %v379 = vsel %vm371, 1, 0
        %v380 = vsel %vm372, 1, 0
        %v381 = vsel %vm373, 1, 0
        %v382 = vcvt.s32.f32 %v374
        %v383 = vcvt.s32.f32 %v375
        %v384 = vcvt.s32.f32 %v376
        %v385 = vcvt.s32.f32 %v377
        %v386 = vcvt.s32.f32 %v378
        %v387 = vcvt.s32.f32 %v379
        %v388 = vcvt.s32.f32 %v380
        %v389 = vcvt.s32.f32 %v381
        %v390 = vadd.f32 %v346, %v382
        %v391 = vadd.f32 %v347, %v383
        %v392 = vadd.f32 %v348, %v384
        %v393 = vadd.f32 %v349, %v385
        %v394 = vadd.f32 %v350, %v386
        %v395 = vadd.f32 %v351, %v387
        %v396 = vadd.f32 %v352, %v388
        %v397 = vadd.f32 %v353, %v389
        %398 = vset.pattern.permute.xlu0 4
        %399 = vperm.xlu0 %398, %v215
        %v400 = vpop.permute.xlu0 %399
        %401 = vset.pattern.permute.xlu0 4
        %402 = vperm.xlu0 %401, %v216
        %v403 = vpop.permute.xlu0 %402
        %404 = vset.pattern.permute.xlu0 4
        %405 = vperm.xlu0 %404, %v217
        %v406 = vpop.permute.xlu0 %405
        %407 = vset.pattern.permute.xlu0 4
        %408 = vperm.xlu0 %407, %v218
        %v409 = vpop.permute.xlu0 %408
        %vm410 = vcmp.eq.s32.totalorder %v400, %v220
        %vm411 = vcmp.eq.s32.totalorder %v400, %v221
        %vm412 = vcmp.eq.s32.totalorder %v403, %v220
        %vm413 = vcmp.eq.s32.totalorder %v403, %v221
        %vm414 = vcmp.eq.s32.totalorder %v406, %v220
        %vm415 = vcmp.eq.s32.totalorder %v406, %v221
        %vm416 = vcmp.eq.s32.totalorder %v409, %v220
        %vm417 = vcmp.eq.s32.totalorder %v409, %v221
        %v418 = vsel %vm410, 1, 0
        %v419 = vsel %vm411, 1, 0
        %v420 = vsel %vm412, 1, 0
        %v421 = vsel %vm413, 1, 0
        %v422 = vsel %vm414, 1, 0
        %v423 = vsel %vm415, 1, 0
        %v424 = vsel %vm416, 1, 0
        %v425 = vsel %vm417, 1, 0
        %v426 = vcvt.s32.f32 %v418
        %v427 = vcvt.s32.f32 %v419
        %v428 = vcvt.s32.f32 %v420
        %v429 = vcvt.s32.f32 %v421
        %v430 = vcvt.s32.f32 %v422
        %v431 = vcvt.s32.f32 %v423
        %v432 = vcvt.s32.f32 %v424
        %v433 = vcvt.s32.f32 %v425
        %v434 = vadd.f32 %v390, %v426
        %v435 = vadd.f32 %v391, %v427
        %v436 = vadd.f32 %v392, %v428
        %v437 = vadd.f32 %v393, %v429
        %v438 = vadd.f32 %v394, %v430
        %v439 = vadd.f32 %v395, %v431
        %v440 = vadd.f32 %v396, %v432
        %v441 = vadd.f32 %v397, %v433
        %442 = vset.pattern.permute.xlu0 5
        %443 = vperm.xlu0 %442, %v215
        %v444 = vpop.permute.xlu0 %443
        %445 = vset.pattern.permute.xlu0 5
        %446 = vperm.xlu0 %445, %v216
        %v447 = vpop.permute.xlu0 %446
        %448 = vset.pattern.permute.xlu0 5
        %449 = vperm.xlu0 %448, %v217
        %v450 = vpop.permute.xlu0 %449
        %451 = vset.pattern.permute.xlu0 5
        %452 = vperm.xlu0 %451, %v218
        %v453 = vpop.permute.xlu0 %452
        %vm454 = vcmp.eq.s32.totalorder %v444, %v220
        %vm455 = vcmp.eq.s32.totalorder %v444, %v221
        %vm456 = vcmp.eq.s32.totalorder %v447, %v220
        %vm457 = vcmp.eq.s32.totalorder %v447, %v221
        %vm458 = vcmp.eq.s32.totalorder %v450, %v220
        %vm459 = vcmp.eq.s32.totalorder %v450, %v221
        %vm460 = vcmp.eq.s32.totalorder %v453, %v220
        %vm461 = vcmp.eq.s32.totalorder %v453, %v221
        %v462 = vsel %vm454, 1, 0
        %v463 = vsel %vm455, 1, 0
        %v464 = vsel %vm456, 1, 0
        %v465 = vsel %vm457, 1, 0
        %v466 = vsel %vm458, 1, 0
        %v467 = vsel %vm459, 1, 0
        %v468 = vsel %vm460, 1, 0
        %v469 = vsel %vm461, 1, 0
        %v470 = vcvt.s32.f32 %v462
        %v471 = vcvt.s32.f32 %v463
        %v472 = vcvt.s32.f32 %v464
        %v473 = vcvt.s32.f32 %v465
        %v474 = vcvt.s32.f32 %v466
        %v475 = vcvt.s32.f32 %v467
        %v476 = vcvt.s32.f32 %v468
        %v477 = vcvt.s32.f32 %v469
        %v478 = vadd.f32 %v434, %v470
        %v479 = vadd.f32 %v435, %v471
        %v480 = vadd.f32 %v436, %v472
        %v481 = vadd.f32 %v437, %v473
        %v482 = vadd.f32 %v438, %v474
        %v483 = vadd.f32 %v439, %v475
        %v484 = vadd.f32 %v440, %v476
        %v485 = vadd.f32 %v441, %v477
        %486 = vset.pattern.permute.xlu0 6
        %487 = vperm.xlu0 %486, %v215
        %v488 = vpop.permute.xlu0 %487
        %489 = vset.pattern.permute.xlu0 6
        %490 = vperm.xlu0 %489, %v216
        %v491 = vpop.permute.xlu0 %490
        %492 = vset.pattern.permute.xlu0 6
        %493 = vperm.xlu0 %492, %v217
        %v494 = vpop.permute.xlu0 %493
        %495 = vset.pattern.permute.xlu0 6
        %496 = vperm.xlu0 %495, %v218
        %v497 = vpop.permute.xlu0 %496
        %vm498 = vcmp.eq.s32.totalorder %v488, %v220
        %vm499 = vcmp.eq.s32.totalorder %v488, %v221
        %vm500 = vcmp.eq.s32.totalorder %v491, %v220
        %vm501 = vcmp.eq.s32.totalorder %v491, %v221
        %vm502 = vcmp.eq.s32.totalorder %v494, %v220
        %vm503 = vcmp.eq.s32.totalorder %v494, %v221
        %vm504 = vcmp.eq.s32.totalorder %v497, %v220
        %vm505 = vcmp.eq.s32.totalorder %v497, %v221
        %v506 = vsel %vm498, 1, 0
        %v507 = vsel %vm499, 1, 0
        %v508 = vsel %vm500, 1, 0
        %v509 = vsel %vm501, 1, 0
        %v510 = vsel %vm502, 1, 0
        %v511 = vsel %vm503, 1, 0
        %v512 = vsel %vm504, 1, 0
        %v513 = vsel %vm505, 1, 0
        %v514 = vcvt.s32.f32 %v506
        %v515 = vcvt.s32.f32 %v507
        %v516 = vcvt.s32.f32 %v508
        %v517 = vcvt.s32.f32 %v509
        %v518 = vcvt.s32.f32 %v510
        %v519 = vcvt.s32.f32 %v511
        %v520 = vcvt.s32.f32 %v512
        %v521 = vcvt.s32.f32 %v513
        %v522 = vadd.f32 %v478, %v514
        %v523 = vadd.f32 %v479, %v515
        %v524 = vadd.f32 %v480, %v516
        %v525 = vadd.f32 %v481, %v517
        %v526 = vadd.f32 %v482, %v518
        %v527 = vadd.f32 %v483, %v519
        %v528 = vadd.f32 %v484, %v520
        %v529 = vadd.f32 %v485, %v521
        %530 = vset.pattern.permute.xlu0 7
        %531 = vperm.xlu0 %530, %v215
        %v532 = vpop.permute.xlu0 %531
        %533 = vset.pattern.permute.xlu0 7
        %534 = vperm.xlu0 %533, %v216
        %v535 = vpop.permute.xlu0 %534
        %536 = vset.pattern.permute.xlu0 7
        %537 = vperm.xlu0 %536, %v217
        %v538 = vpop.permute.xlu0 %537
        %539 = vset.pattern.permute.xlu0 7
        %540 = vperm.xlu0 %539, %v218
        %v541 = vpop.permute.xlu0 %540
        %vm542 = vcmp.eq.s32.totalorder %v532, %v220
        %vm543 = vcmp.eq.s32.totalorder %v532, %v221
        %vm544 = vcmp.eq.s32.totalorder %v535, %v220
        %vm545 = vcmp.eq.s32.totalorder %v535, %v221
        %vm546 = vcmp.eq.s32.totalorder %v538, %v220
        %vm547 = vcmp.eq.s32.totalorder %v538, %v221
        %vm548 = vcmp.eq.s32.totalorder %v541, %v220
        %vm549 = vcmp.eq.s32.totalorder %v541, %v221
        %v550 = vsel %vm542, 1, 0
        %v551 = vsel %vm543, 1, 0
        %v552 = vsel %vm544, 1, 0
        %v553 = vsel %vm545, 1, 0
        %v554 = vsel %vm546, 1, 0
        %v555 = vsel %vm547, 1, 0
        %v556 = vsel %vm548, 1, 0
        %v557 = vsel %vm549, 1, 0
        %v558 = vcvt.s32.f32 %v550
        %v559 = vcvt.s32.f32 %v551
        %v560 = vcvt.s32.f32 %v552
        %v561 = vcvt.s32.f32 %v553
        %v562 = vcvt.s32.f32 %v554
        %v563 = vcvt.s32.f32 %v555
        %v564 = vcvt.s32.f32 %v556
        %v565 = vcvt.s32.f32 %v557
        %v566 = vadd.f32 %v522, %v558
        %v567 = vadd.f32 %v523, %v559
        %v568 = vadd.f32 %v524, %v560
        %v569 = vadd.f32 %v525, %v561
        %v570 = vadd.f32 %v526, %v562
        %v571 = vadd.f32 %v527, %v563
        %v572 = vadd.f32 %v528, %v564
        %v573 = vadd.f32 %v529, %v565
        %574 = vset.pattern.permute.xlu0 8
        %575 = vperm.xlu0 %574, %v215
        %v576 = vpop.permute.xlu0 %575
        %577 = vset.pattern.permute.xlu0 8
        %578 = vperm.xlu0 %577, %v216
        %v579 = vpop.permute.xlu0 %578
        %580 = vset.pattern.permute.xlu0 8
        %581 = vperm.xlu0 %580, %v217
        %v582 = vpop.permute.xlu0 %581
        %583 = vset.pattern.permute.xlu0 8
        %584 = vperm.xlu0 %583, %v218
        %v585 = vpop.permute.xlu0 %584
        %vm586 = vcmp.eq.s32.totalorder %v576, %v220
        %vm587 = vcmp.eq.s32.totalorder %v576, %v221
        %vm588 = vcmp.eq.s32.totalorder %v579, %v220
        %vm589 = vcmp.eq.s32.totalorder %v579, %v221
        %vm590 = vcmp.eq.s32.totalorder %v582, %v220
        %vm591 = vcmp.eq.s32.totalorder %v582, %v221
        %vm592 = vcmp.eq.s32.totalorder %v585, %v220
        %vm593 = vcmp.eq.s32.totalorder %v585, %v221
        %v594 = vsel %vm586, 1, 0
        %v595 = vsel %vm587, 1, 0
        %v596 = vsel %vm588, 1, 0
        %v597 = vsel %vm589, 1, 0
        %v598 = vsel %vm590, 1, 0
        %v599 = vsel %vm591, 1, 0
        %v600 = vsel %vm592, 1, 0
        %v601 = vsel %vm593, 1, 0
        %v602 = vcvt.s32.f32 %v594
        %v603 = vcvt.s32.f32 %v595
        %v604 = vcvt.s32.f32 %v596
        %v605 = vcvt.s32.f32 %v597
        %v606 = vcvt.s32.f32 %v598
        %v607 = vcvt.s32.f32 %v599
        %v608 = vcvt.s32.f32 %v600
        %v609 = vcvt.s32.f32 %v601
        %v610 = vadd.f32 %v566, %v602
        %v611 = vadd.f32 %v567, %v603
        %v612 = vadd.f32 %v568, %v604
        %v613 = vadd.f32 %v569, %v605
        %v614 = vadd.f32 %v570, %v606
        %v615 = vadd.f32 %v571, %v607
        %v616 = vadd.f32 %v572, %v608
        %v617 = vadd.f32 %v573, %v609
        %618 = vset.pattern.permute.xlu0 9
        %619 = vperm.xlu0 %618, %v215
        %v620 = vpop.permute.xlu0 %619
        %621 = vset.pattern.permute.xlu0 9
        %622 = vperm.xlu0 %621, %v216
        %v623 = vpop.permute.xlu0 %622
        %624 = vset.pattern.permute.xlu0 9
        %625 = vperm.xlu0 %624, %v217
        %v626 = vpop.permute.xlu0 %625
        %627 = vset.pattern.permute.xlu0 9
        %628 = vperm.xlu0 %627, %v218
        %v629 = vpop.permute.xlu0 %628
        %vm630 = vcmp.eq.s32.totalorder %v620, %v220
        %vm631 = vcmp.eq.s32.totalorder %v620, %v221
        %vm632 = vcmp.eq.s32.totalorder %v623, %v220
        %vm633 = vcmp.eq.s32.totalorder %v623, %v221
        %vm634 = vcmp.eq.s32.totalorder %v626, %v220
        %vm635 = vcmp.eq.s32.totalorder %v626, %v221
        %vm636 = vcmp.eq.s32.totalorder %v629, %v220
        %vm637 = vcmp.eq.s32.totalorder %v629, %v221
        %v638 = vsel %vm630, 1, 0
        %v639 = vsel %vm631, 1, 0
        %v640 = vsel %vm632, 1, 0
        %v641 = vsel %vm633, 1, 0
        %v642 = vsel %vm634, 1, 0
        %v643 = vsel %vm635, 1, 0
        %v644 = vsel %vm636, 1, 0
        %v645 = vsel %vm637, 1, 0
        %v646 = vcvt.s32.f32 %v638
        %v647 = vcvt.s32.f32 %v639
        %v648 = vcvt.s32.f32 %v640
        %v649 = vcvt.s32.f32 %v641
        %v650 = vcvt.s32.f32 %v642
        %v651 = vcvt.s32.f32 %v643
        %v652 = vcvt.s32.f32 %v644
        %v653 = vcvt.s32.f32 %v645
        %v654 = vadd.f32 %v610, %v646
        %v655 = vadd.f32 %v611, %v647
        %v656 = vadd.f32 %v612, %v648
        %v657 = vadd.f32 %v613, %v649
        %v658 = vadd.f32 %v614, %v650
        %v659 = vadd.f32 %v615, %v651
        %v660 = vadd.f32 %v616, %v652
        %v661 = vadd.f32 %v617, %v653
        %662 = vset.pattern.permute.xlu0 10
        %663 = vperm.xlu0 %662, %v215
        %v664 = vpop.permute.xlu0 %663
        %665 = vset.pattern.permute.xlu0 10
        %666 = vperm.xlu0 %665, %v216
        %v667 = vpop.permute.xlu0 %666
        %668 = vset.pattern.permute.xlu0 10
        %669 = vperm.xlu0 %668, %v217
        %v670 = vpop.permute.xlu0 %669
        %671 = vset.pattern.permute.xlu0 10
        %672 = vperm.xlu0 %671, %v218
        %v673 = vpop.permute.xlu0 %672
        %vm674 = vcmp.eq.s32.totalorder %v664, %v220
        %vm675 = vcmp.eq.s32.totalorder %v664, %v221
        %vm676 = vcmp.eq.s32.totalorder %v667, %v220
        %vm677 = vcmp.eq.s32.totalorder %v667, %v221
        %vm678 = vcmp.eq.s32.totalorder %v670, %v220
        %vm679 = vcmp.eq.s32.totalorder %v670, %v221
        %vm680 = vcmp.eq.s32.totalorder %v673, %v220
        %vm681 = vcmp.eq.s32.totalorder %v673, %v221
        %v682 = vsel %vm674, 1, 0
        %v683 = vsel %vm675, 1, 0
        %v684 = vsel %vm676, 1, 0
        %v685 = vsel %vm677, 1, 0
        %v686 = vsel %vm678, 1, 0
        %v687 = vsel %vm679, 1, 0
        %v688 = vsel %vm680, 1, 0
        %v689 = vsel %vm681, 1, 0
        %v690 = vcvt.s32.f32 %v682
        %v691 = vcvt.s32.f32 %v683
        %v692 = vcvt.s32.f32 %v684
        %v693 = vcvt.s32.f32 %v685
        %v694 = vcvt.s32.f32 %v686
        %v695 = vcvt.s32.f32 %v687
        %v696 = vcvt.s32.f32 %v688
        %v697 = vcvt.s32.f32 %v689
        %v698 = vadd.f32 %v654, %v690
        %v699 = vadd.f32 %v655, %v691
        %v700 = vadd.f32 %v656, %v692
        %v701 = vadd.f32 %v657, %v693
        %v702 = vadd.f32 %v658, %v694
        %v703 = vadd.f32 %v659, %v695
        %v704 = vadd.f32 %v660, %v696
        %v705 = vadd.f32 %v661, %v697
        %706 = vset.pattern.permute.xlu0 11
        %707 = vperm.xlu0 %706, %v215
        %v708 = vpop.permute.xlu0 %707
        %709 = vset.pattern.permute.xlu0 11
        %710 = vperm.xlu0 %709, %v216
        %v711 = vpop.permute.xlu0 %710
        %712 = vset.pattern.permute.xlu0 11
        %713 = vperm.xlu0 %712, %v217
        %v714 = vpop.permute.xlu0 %713
        %715 = vset.pattern.permute.xlu0 11
        %716 = vperm.xlu0 %715, %v218
        %v717 = vpop.permute.xlu0 %716
        %vm718 = vcmp.eq.s32.totalorder %v708, %v220
        %vm719 = vcmp.eq.s32.totalorder %v708, %v221
        %vm720 = vcmp.eq.s32.totalorder %v711, %v220
        %vm721 = vcmp.eq.s32.totalorder %v711, %v221
        %vm722 = vcmp.eq.s32.totalorder %v714, %v220
        %vm723 = vcmp.eq.s32.totalorder %v714, %v221
        %vm724 = vcmp.eq.s32.totalorder %v717, %v220
        %vm725 = vcmp.eq.s32.totalorder %v717, %v221
        %v726 = vsel %vm718, 1, 0
        %v727 = vsel %vm719, 1, 0
        %v728 = vsel %vm720, 1, 0
        %v729 = vsel %vm721, 1, 0
        %v730 = vsel %vm722, 1, 0
        %v731 = vsel %vm723, 1, 0
        %v732 = vsel %vm724, 1, 0
        %v733 = vsel %vm725, 1, 0
        %v734 = vcvt.s32.f32 %v726
        %v735 = vcvt.s32.f32 %v727
        %v736 = vcvt.s32.f32 %v728
        %v737 = vcvt.s32.f32 %v729
        %v738 = vcvt.s32.f32 %v730
        %v739 = vcvt.s32.f32 %v731
        %v740 = vcvt.s32.f32 %v732
        %v741 = vcvt.s32.f32 %v733
        %v742 = vadd.f32 %v698, %v734
        %v743 = vadd.f32 %v699, %v735
        %v744 = vadd.f32 %v700, %v736
        %v745 = vadd.f32 %v701, %v737
        %v746 = vadd.f32 %v702, %v738
        %v747 = vadd.f32 %v703, %v739
        %v748 = vadd.f32 %v704, %v740
        %v749 = vadd.f32 %v705, %v741
        %v750 = vld [vmem:[#allocation5] sm:$0xff]
        %v751 = vld [vmem:[#allocation5 + $0x8] sm:$0xff]
        %v752 = vld [vmem:[#allocation5 + $0x10] sm:$0xff]
        %v753 = vld [vmem:[#allocation5 + $0x18] sm:$0xff]
        %v754 = vld [vmem:[#allocation5 + $0x20] sm:$0xff]
        %v755 = vld [vmem:[#allocation5 + $0x28] sm:$0xff]
        %v756 = vld [vmem:[#allocation5 + $0x30] sm:$0xff]
        %v757 = vld [vmem:[#allocation5 + $0x38] sm:$0xff]
        %v758 = vld [vmem:[#allocation5 + $0x40] sm:$0xff]
        %v759 = vld [vmem:[#allocation5 + $0x48] sm:$0xff]
        %v760 = vld [vmem:[#allocation5 + $0x50] sm:$0xff]
        %v761 = vld [vmem:[#allocation5 + $0x58] sm:$0xff]
        %v762 = vpack.c.bf16 %v744, %v742
        %v763 = vpack.c.bf16 %v745, %v743
        %v764 = vpack.c.bf16 %v748, %v746
        %v765 = vpack.c.bf16 %v749, %v747
        %v766 = vld [vmem:[%s163] sm:$0xff]
        %v767 = vld [vmem:[%s163 + $0x8] sm:$0xf]
        %v768 = vld [vmem:[%s163 + $0xc] sm:$0xff]
        %v769 = vld [vmem:[%s163 + $0x14] sm:$0xf]
        %v770 = vld [vmem:[%s163 + $0x18] sm:$0xff]
        %v771 = vld [vmem:[%s163 + $0x20] sm:$0xf]
        %v772 = vld [vmem:[%s163 + $0x24] sm:$0xff]
        %v773 = vld [vmem:[%s163 + $0x2c] sm:$0xf]
        %v774 = vld [vmem:[%s163 + $0x30] sm:$0xff]
        %v775 = vld [vmem:[%s163 + $0x38] sm:$0xf]
        %v776 = vld [vmem:[%s163 + $0x3c] sm:$0xff]
        %v777 = vld [vmem:[%s163 + $0x44] sm:$0xf]
        %v778 = vld [vmem:[%s163 + $0x48] sm:$0xff]
        %v779 = vld [vmem:[%s163 + $0x50] sm:$0xf]
        %v780 = vld [vmem:[%s163 + $0x54] sm:$0xff]
        %v781 = vld [vmem:[%s163 + $0x5c] sm:$0xf]
        %v782 = vld [vmem:[%s163 + $0x60] sm:$0xff]
        %v783 = vld [vmem:[%s163 + $0x68] sm:$0xf]
        %v784 = vld [vmem:[%s163 + $0x6c] sm:$0xff]
        %v785 = vld [vmem:[%s163 + $0x74] sm:$0xf]
        %v786 = vld [vmem:[%s163 + $0x78] sm:$0xff]
        %v787 = vld [vmem:[%s163 + $0x80] sm:$0xf]
        %v788 = vld [vmem:[%s163 + $0x84] sm:$0xff]
        %v789 = vld [vmem:[%s163 + $0x8c] sm:$0xf]
        %v790 = vld [vmem:[%s163 + $0x90] sm:$0xff]
        %v791 = vld [vmem:[%s163 + $0x98] sm:$0xf]
        %v792 = vld [vmem:[%s163 + $0x9c] sm:$0xff]
        %v793 = vld [vmem:[%s163 + $0xa4] sm:$0xf]
        %v794 = vld [vmem:[%s163 + $0xa8] sm:$0xff]
        %v795 = vld [vmem:[%s163 + $0xb0] sm:$0xf]
        %v796 = vld [vmem:[%s163 + $0xb4] sm:$0xff]
        %v797 = vld [vmem:[%s163 + $0xbc] sm:$0xf]
        %v798 = vld [vmem:[%s163 + $0xc0] sm:$0xff]
        %v799 = vld [vmem:[%s163 + $0xc8] sm:$0xf]
        %v800 = vld [vmem:[%s163 + $0xcc] sm:$0xff]
        %v801 = vld [vmem:[%s163 + $0xd4] sm:$0xf]
        %v802 = vld [vmem:[%s163 + $0xd8] sm:$0xff]
        %v803 = vld [vmem:[%s163 + $0xe0] sm:$0xf]
        %v804 = vld [vmem:[%s163 + $0xe4] sm:$0xff]
        %v805 = vld [vmem:[%s163 + $0xec] sm:$0xf]
        %v806 = vld [vmem:[%s163 + $0xf0] sm:$0xff]
        %v807 = vld [vmem:[%s163 + $0xf8] sm:$0xf]
        %v808 = vld [vmem:[%s163 + $0xfc] sm:$0xff]
        %v809 = vld [vmem:[%s163 + $0x104] sm:$0xf]
        %v810 = vld [vmem:[%s163 + $0x108] sm:$0xff]
        %v811 = vld [vmem:[%s163 + $0x110] sm:$0xf]
        %v812 = vld [vmem:[%s163 + $0x114] sm:$0xff]
        %v813 = vld [vmem:[%s163 + $0x11c] sm:$0xf]
        %v814 = vld [vmem:[%s163 + $0x120] sm:$0xff]
        %v815 = vld [vmem:[%s163 + $0x128] sm:$0xf]
        %v816 = vld [vmem:[%s163 + $0x12c] sm:$0xff]
        %v817 = vld [vmem:[%s163 + $0x134] sm:$0xf]
        %v818 = vld [vmem:[%s163 + $0x138] sm:$0xff]
        %v819 = vld [vmem:[%s163 + $0x140] sm:$0xf]
        %v820 = vld [vmem:[%s163 + $0x144] sm:$0xff]
        %v821 = vld [vmem:[%s163 + $0x14c] sm:$0xf]
        %v822 = vld [vmem:[%s163 + $0x150] sm:$0xff]
        %v823 = vld [vmem:[%s163 + $0x158] sm:$0xf]
        %v824 = vld [vmem:[%s163 + $0x15c] sm:$0xff]
        %v825 = vld [vmem:[%s163 + $0x164] sm:$0xf]
        %v826 = vld [vmem:[%s163 + $0x168] sm:$0xff]
        %v827 = vld [vmem:[%s163 + $0x170] sm:$0xf]
        %v828 = vld [vmem:[%s163 + $0x174] sm:$0xff]
        %v829 = vld [vmem:[%s163 + $0x17c] sm:$0xf]
        %v894 = vunpack.c.l.b16 %v766
        %v895 = vunpack.c.h.b16 %v766
        %v896 = vunpack.c.l.b16 %v767
        %v897 = vunpack.c.l.b16 %v768
        %v898 = vunpack.c.h.b16 %v768
        %v899 = vunpack.c.l.b16 %v769
        %v900 = vunpack.c.l.b16 %v770
        %v901 = vunpack.c.h.b16 %v770
        %v902 = vunpack.c.l.b16 %v771
        %v903 = vunpack.c.l.b16 %v772
        %v904 = vunpack.c.h.b16 %v772
        %v905 = vunpack.c.l.b16 %v773
        %v906 = vunpack.c.l.b16 %v774
        %v907 = vunpack.c.h.b16 %v774
        %v908 = vunpack.c.l.b16 %v775
        %v909 = vunpack.c.l.b16 %v776
        %v910 = vunpack.c.h.b16 %v776
        %v911 = vunpack.c.l.b16 %v777
        %v912 = vunpack.c.l.b16 %v778
        %v913 = vunpack.c.h.b16 %v778
        %v914 = vunpack.c.l.b16 %v779
        %v915 = vunpack.c.l.b16 %v780
        %v916 = vunpack.c.h.b16 %v780
        %v917 = vunpack.c.l.b16 %v781
        %v918 = vunpack.c.l.b16 %v782
        %v919 = vunpack.c.h.b16 %v782
        %v920 = vunpack.c.l.b16 %v783
        %v921 = vunpack.c.l.b16 %v784
        %v922 = vunpack.c.h.b16 %v784
        %v923 = vunpack.c.l.b16 %v785
        %v924 = vunpack.c.l.b16 %v786
        %v925 = vunpack.c.h.b16 %v786
        %v926 = vunpack.c.l.b16 %v787
        %v927 = vunpack.c.l.b16 %v788
        %v928 = vunpack.c.h.b16 %v788
        %v929 = vunpack.c.l.b16 %v789
        %v930 = vunpack.c.l.b16 %v790
        %v931 = vunpack.c.h.b16 %v790
        %v932 = vunpack.c.l.b16 %v791
        %v933 = vunpack.c.l.b16 %v792
        %v934 = vunpack.c.h.b16 %v792
        %v935 = vunpack.c.l.b16 %v793
        %v936 = vunpack.c.l.b16 %v794
        %v937 = vunpack.c.h.b16 %v794
        %v938 = vunpack.c.l.b16 %v795
        %v939 = vunpack.c.l.b16 %v796
        %v940 = vunpack.c.h.b16 %v796
        %v941 = vunpack.c.l.b16 %v797
        %v942 = vunpack.c.l.b16 %v798
        %v943 = vunpack.c.h.b16 %v798
        %v944 = vunpack.c.l.b16 %v799
        %v945 = vunpack.c.l.b16 %v800
        %v946 = vunpack.c.h.b16 %v800
        %v947 = vunpack.c.l.b16 %v801
        %v948 = vunpack.c.l.b16 %v802
        %v949 = vunpack.c.h.b16 %v802
        %v950 = vunpack.c.l.b16 %v803
        %v951 = vunpack.c.l.b16 %v804
        %v952 = vunpack.c.h.b16 %v804
        %v953 = vunpack.c.l.b16 %v805
        %v954 = vunpack.c.l.b16 %v806
        %v955 = vunpack.c.h.b16 %v806
        %v956 = vunpack.c.l.b16 %v807
        %v957 = vunpack.c.l.b16 %v808
        %v958 = vunpack.c.h.b16 %v808
        %v959 = vunpack.c.l.b16 %v809
        %v960 = vunpack.c.l.b16 %v810
        %v961 = vunpack.c.h.b16 %v810
        %v962 = vunpack.c.l.b16 %v811
        %v963 = vunpack.c.l.b16 %v812
        %v964 = vunpack.c.h.b16 %v812
        %v965 = vunpack.c.l.b16 %v813
        %v966 = vunpack.c.l.b16 %v814
        %v967 = vunpack.c.h.b16 %v814
        %v968 = vunpack.c.l.b16 %v815
        %v969 = vunpack.c.l.b16 %v816
        %v970 = vunpack.c.h.b16 %v816
        %v971 = vunpack.c.l.b16 %v817
        %v972 = vunpack.c.l.b16 %v818
        %v973 = vunpack.c.h.b16 %v818
        %v974 = vunpack.c.l.b16 %v819
        %v975 = vunpack.c.l.b16 %v820
        %v976 = vunpack.c.h.b16 %v820
        %v977 = vunpack.c.l.b16 %v821
        %v978 = vunpack.c.l.b16 %v822
        %v979 = vunpack.c.h.b16 %v822
        %v980 = vunpack.c.l.b16 %v823
        %v981 = vunpack.c.l.b16 %v824
        %v982 = vunpack.c.h.b16 %v824
        %v983 = vunpack.c.l.b16 %v825
        %v984 = vunpack.c.l.b16 %v826
        %v985 = vunpack.c.h.b16 %v826
        %v986 = vunpack.c.l.b16 %v827
        %v987 = vunpack.c.l.b16 %v828
        %v988 = vunpack.c.h.b16 %v828
        %v989 = vunpack.c.l.b16 %v829
        %v990 = vpack.c.b16 %v897, %v894
        %v991 = vpack.c.b16 %v898, %v895
        %v992 = vpack.c.b16 %v899, %v896
        %v993 = vpack.c.b16 %v903, %v900
        %v994 = vpack.c.b16 %v904, %v901
        %v995 = vpack.c.b16 %v905, %v902
        %v996 = vpack.c.b16 %v909, %v906
        %v997 = vpack.c.b16 %v910, %v907
        %v998 = vpack.c.b16 %v911, %v908
        %v999 = vpack.c.b16 %v915, %v912
        %v1000 = vpack.c.b16 %v916, %v913
        %v1001 = vpack.c.b16 %v917, %v914
        %v1002 = vpack.c.b16 %v921, %v918
        %v1003 = vpack.c.b16 %v922, %v919
        %v1004 = vpack.c.b16 %v923, %v920
        %v1005 = vpack.c.b16 %v927, %v924
        %v1006 = vpack.c.b16 %v928, %v925
        %v1007 = vpack.c.b16 %v929, %v926
        %v1008 = vpack.c.b16 %v933, %v930
        %v1009 = vpack.c.b16 %v934, %v931
        %v1010 = vpack.c.b16 %v935, %v932
        %v1011 = vpack.c.b16 %v939, %v936
        %v1012 = vpack.c.b16 %v940, %v937
        %v1013 = vpack.c.b16 %v941, %v938
        %v1014 = vpack.c.b16 %v945, %v942
        %v1015 = vpack.c.b16 %v946, %v943
        %v1016 = vpack.c.b16 %v947, %v944
        %v1017 = vpack.c.b16 %v951, %v948
        %v1018 = vpack.c.b16 %v952, %v949
        %v1019 = vpack.c.b16 %v953, %v950
        %v1020 = vpack.c.b16 %v957, %v954
        %v1021 = vpack.c.b16 %v958, %v955
        %v1022 = vpack.c.b16 %v959, %v956
        %v1023 = vpack.c.b16 %v963, %v960
        %v1024 = vpack.c.b16 %v964, %v961
        %v1025 = vpack.c.b16 %v965, %v962
        %v1026 = vpack.c.b16 %v969, %v966
        %v1027 = vpack.c.b16 %v970, %v967
        %v1028 = vpack.c.b16 %v971, %v968
        %v1029 = vpack.c.b16 %v975, %v972
        %v1030 = vpack.c.b16 %v976, %v973
        %v1031 = vpack.c.b16 %v977, %v974
        %v1032 = vpack.c.b16 %v981, %v978
        %v1033 = vpack.c.b16 %v982, %v979
        %v1034 = vpack.c.b16 %v983, %v980
        %v1035 = vpack.c.b16 %v987, %v984
        %v1036 = vpack.c.b16 %v988, %v985
        %v1037 = vpack.c.b16 %v989, %v986
        %1086 = vmatprep.subr.bf16.mxu0 %v1012
        %1087 = vmatpush1.bf16.msra.mxu0 %v1011
        %1088 = vmatprep.subr.bf16.mxu0 %v1009
        %1089 = vmatpush1.bf16.msra.mxu0 %v1008
        %1090 = vmatprep.subr.bf16.mxu0 %v1006
        %1091 = vmatpush1.bf16.msra.mxu0 %v1005
        %1092 = vmatprep.subr.bf16.mxu0 %v1003
        %1093 = vmatpush1.bf16.msra.mxu0 %v1002
        %1094 = vmatprep.subr.bf16.mxu0 %v1000
        %1095 = vmatpush1.bf16.msra.mxu0 %v999
        %1096 = vmatprep.subr.bf16.mxu0 %v997
        %1097 = vmatpush1.bf16.msra.mxu0 %v996
        %1098 = vmatprep.subr.bf16.mxu0 %v994
        %1099 = vmatpush1.bf16.msra.mxu0 %v993
        %1100 = vmatprep.subr.bf16.mxu0 %v991
        %1101 = vmatpush1.bf16.msra.mxu0 %v990
        %1102 = vmatprep.subr.bf16.mxu0 %v1036
        %1103 = vmatpush2.bf16.msra.mxu0 %v1035
        %1104 = vmatprep.subr.bf16.mxu0 %v1033
        %1105 = vmatpush2.bf16.msra.mxu0 %v1032
        %1106 = vmatprep.subr.bf16.mxu0 %v1030
        %1107 = vmatpush2.bf16.msra.mxu0 %v1029
        %1108 = vmatprep.subr.bf16.mxu0 %v1027
        %1109 = vmatpush2.bf16.msra.mxu0 %v1026
        %1110 = vmatprep.subr.bf16.mxu0 %v1024
        %1111 = vmatpush2.bf16.msra.mxu0 %v1023
        %1112 = vmatprep.subr.bf16.mxu0 %v1021
        %1113 = vmatpush2.bf16.msra.mxu0 %v1020
        %1114 = vmatprep.subr.bf16.mxu0 %v1018
        %1115 = vmatpush2.bf16.msra.mxu0 %v1017
        %1116 = vmatprep.subr.bf16.mxu0 %v1015
        %1117 = vmatpush2.bf16.msra.mxu0 %v1014
        %1118 = vmatprep.mubr.bf16.mxu0 %v763
        %1119 = vmatmul.mubr.bf16.gmra.mxu0 %v762
        %v1120 = vpop.f32.mrf.mxu0
        %v1121 = vadd.f32 0.0, %v1120
        %v1122 = vpop.f32.mrf.mxu0
        %v1123 = vadd.f32 0.0, %v1122
        %v1124 = vpop.f32.mrf.mxu0
        %v1125 = vadd.f32 0.0, %v1124
        %v1126 = vpop.f32.mrf.mxu0
        %v1127 = vadd.f32 0.0, %v1126
        %1128 = vmatprep.mubr.bf16.mxu0 %v765
        %1129 = vmatmul.mubr.bf16.gmra.mxu0 %v764
        %v1130 = vpop.f32.mrf.mxu0
        %v1131 = vadd.f32 0.0, %v1130
        %v1132 = vpop.f32.mrf.mxu0
        %v1133 = vadd.f32 0.0, %v1132
        %v1134 = vpop.f32.mrf.mxu0
        %v1135 = vadd.f32 0.0, %v1134
        %v1136 = vpop.f32.mrf.mxu0
        %v1137 = vadd.f32 0.0, %v1136
        %1138 = vdwg.mxu0
        %1139 = vmatprep.subr.bf16.mxu0 0
        %1140 = vmatpush1.bf16.msra.mxu0 %v1013
        %1141 = vmatprep.subr.bf16.mxu0 0
        %1142 = vmatpush1.bf16.msra.mxu0 %v1010
        %1143 = vmatprep.subr.bf16.mxu0 0
        %1144 = vmatpush1.bf16.msra.mxu0 %v1007
        %1145 = vmatprep.subr.bf16.mxu0 0
        %1146 = vmatpush1.bf16.msra.mxu0 %v1004
        %1147 = vmatprep.subr.bf16.mxu0 0
        %1148 = vmatpush1.bf16.msra.mxu0 %v1001
        %1149 = vmatprep.subr.bf16.mxu0 0
        %1150 = vmatpush1.bf16.msra.mxu0 %v998
        %1151 = vmatprep.subr.bf16.mxu0 0
        %1152 = vmatpush1.bf16.msra.mxu0 %v995
        %1153 = vmatprep.subr.bf16.mxu0 0
        %1154 = vmatpush1.bf16.msra.mxu0 %v992
        %1155 = vmatprep.subr.bf16.mxu0 0
        %1156 = vmatpush2.bf16.msra.mxu0 %v1037
        %1157 = vmatprep.subr.bf16.mxu0 0
        %1158 = vmatpush2.bf16.msra.mxu0 %v1034
        %1159 = vmatprep.subr.bf16.mxu0 0
        %1160 = vmatpush2.bf16.msra.mxu0 %v1031
        %1161 = vmatprep.subr.bf16.mxu0 0
        %1162 = vmatpush2.bf16.msra.mxu0 %v1028
        %1163 = vmatprep.subr.bf16.mxu0 0
        %1164 = vmatpush2.bf16.msra.mxu0 %v1025
        %1165 = vmatprep.subr.bf16.mxu0 0
        %1166 = vmatpush2.bf16.msra.mxu0 %v1022
        %1167 = vmatprep.subr.bf16.mxu0 0
        %1168 = vmatpush2.bf16.msra.mxu0 %v1019
        %1169 = vmatprep.subr.bf16.mxu0 0
        %1170 = vmatpush2.bf16.msra.mxu0 %v1016
        %1171 = vmatprep.mubr.bf16.mxu0 %v763
        %1172 = vmatmul.mubr.bf16.gmra.mxu0 %v762
        %v1173 = vpop.f32.mrf.mxu0
        %v1174 = vadd.f32 0.0, %v1173
        %v1175 = vpop.f32.mrf.mxu0
        %v1176 = vpop.f32.mrf.mxu0
        %v1177 = vadd.f32 0.0, %v1176
        %v1178 = vpop.f32.mrf.mxu0
        %1179 = vmatprep.mubr.bf16.mxu0 %v765
        %1180 = vmatmul.mubr.bf16.gmra.mxu0 %v764
        %v1181 = vpop.f32.mrf.mxu0
        %v1182 = vadd.f32 0.0, %v1181
        %v1183 = vpop.f32.mrf.mxu0
        %v1184 = vpop.f32.mrf.mxu0
        %v1185 = vadd.f32 0.0, %v1184
        %v1186 = vpop.f32.mrf.mxu0
        %1187 = vdwg.mxu0
        %v1188 = vadd.f32 %v750, %v1121
        %v1189 = vadd.f32 %v751, %v1123
        %v1190 = vadd.f32 %v752, %v1174
        %v1191 = vadd.f32 %v753, %v1125
        %v1192 = vadd.f32 %v754, %v1127
        %v1193 = vadd.f32 %v755, %v1177
        %v1194 = vadd.f32 %v756, %v1131
        %v1195 = vadd.f32 %v757, %v1133
        %v1196 = vadd.f32 %v758, %v1182
        %v1197 = vadd.f32 %v759, %v1135
        %v1198 = vadd.f32 %v760, %v1137
        %v1199 = vadd.f32 %v761, %v1185
        %1200 = vst [vmem:[#allocation5] sm:$0xff] %v1188
        %1201 = vst [vmem:[#allocation5 + $0x8] sm:$0xff] %v1189
        %1202 = vst [vmem:[#allocation5 + $0x10] sm:$0xff] %v1190
        %1203 = vst [vmem:[#allocation5 + $0x18] sm:$0xff] %v1191
        %1204 = vst [vmem:[#allocation5 + $0x20] sm:$0xff] %v1192
        %1205 = vst [vmem:[#allocation5 + $0x28] sm:$0xff] %v1193
        %1206 = vst [vmem:[#allocation5 + $0x30] sm:$0xff] %v1194
        %1207 = vst [vmem:[#allocation5 + $0x38] sm:$0xff] %v1195
        %1208 = vst [vmem:[#allocation5 + $0x40] sm:$0xff] %v1196
        %1209 = vst [vmem:[#allocation5 + $0x48] sm:$0xff] %v1197
        %1210 = vst [vmem:[#allocation5 + $0x50] sm:$0xff] %v1198
        %1211 = vst [vmem:[#allocation5 + $0x58] sm:$0xff] %v1199
        // Predicated region
        $region37: #{tpu_custom_call.1} parent=27 // pred_check
          %p1212 = pneg %p99
        $region38: #{tpu_custom_call.1} parent=27 // pred_check_branch
          %1214 = sbr.rel (%p1212) target = $region40
        $region39: #{tpu_custom_call.1} parent=27 // pred_region
          %s1215 = smul.u32 4, %s21
          %s1217 = ssub.s32 1536, 1536
          %1218 = vsyncadd [#allocation4], %s1217
          %s1219 = smul.addr %s1215, 3
          %s1220 = smul.addr %s1219, 128
          %s1221 = scalar_lea.hbm %s2, %s1220
          %s1222 = sshll.u32 [#allocation5], 4
          %s1223 = int_to_ptr.vmem [resolvable:$true] %s1222
          %1228 = dma.vmem_to_hbm [thread:$0]  %s1223, 1536, %s1221, [#allocation4], 384, 384, 24
        $region40: #{tpu_custom_call.1} parent=27 // pred_fallthru
          _
        // Predicated region
        $region41: #{tpu_custom_call.1} parent=27 // pred_check
          %p1229 = pneg %p99
        $region42: #{tpu_custom_call.1} parent=27 // pred_check_branch
          %1231 = sbr.rel (%p1229) target = $region44
        $region43: #{tpu_custom_call.1} parent=27 // pred_region
          %1232 = dma.done [#allocation4], 1536
        $region44: #{tpu_custom_call.1} parent=27 // pred_fallthru
          _
      $region28: #{tpu_custom_call.1} parent=5 // pred_fallthru
        _
      %p1233 = scmp.le.s32.totalorder 2, %s12
      // Predicated region
      $region45: #{tpu_custom_call.1} parent=5 // pred_check
        %p1234 = pneg %p1233
      $region46: #{tpu_custom_call.1} parent=5 // pred_check_branch
        %1236 = sbr.rel (%p1234) target = $region48
      $region47: #{tpu_custom_call.1} parent=5 // pred_region
        %s1237 = ssub.s32 %s12, 2
      $region48: #{tpu_custom_call.1} parent=5 // pred_fallthru
        _
    $region6: #{tpu_custom_call.1} parent=1 // loop_footer
      %s16 = sadd.s32 1, %s12
    $region7: #{tpu_custom_call.1} parent=1 // loop_footer_branch
      %11 = sbr.rel target = $region3
    $region8: #{tpu_custom_call.1} parent=1 // loop_exit
      _
    %1238 = vsyncpa [#allocation3], 1
    %s1239 = scalar_lea.sflag [#allocation3], 1
    %1240 = vsyncpa %s1239, 1
    %1241 = vsyncpa [#allocation4], 1
    %s1242 = scalar_lea.sflag [#allocation4], 1
    %1243 = vsyncpa %s1242, 1

</llo_original>
